<compile_context>
chip_gen: v6e
topology: v6e:2x2x1
jax: 0.10.0
libtpu: 0.0.40
codegen_flags: <defaults>
</compile_context>

<pallas_src>
import functools

import jax
import jax.numpy as jnp
from jax import lax
from jax.experimental import pallas as pl
from jax.experimental.pallas import tpu as pltpu


_LANES = 128  # lane width of the 2-D view; 128 maximizes the zero-copy (no-pad) path


def _cdiv(a: int, b: int) -> int:
    return -(-a // b)


def _round_up(x: int, m: int) -> int:
    return ((x + m - 1) // m) * m


def _round_down(x: int, m: int) -> int:
    return (x // m) * m


def _num_tensorcores() -> int:
    """2 on v7x (two TensorCores share chip HBM bandwidth), else 1."""
    try:
        kind = jax.devices()[0].device_kind.lower()
    except Exception:
        return 1
    return 2 if "v7" in kind else 1


def _huber_tile_kernel(yt_ref, yp_ref, out_ref, acc_ref, *,
                       n_tiles, tile_rows, acc_rows, lanes, rows_valid,
                       needs_row_mask):
    """One (tile_rows, lanes) tile of element-wise Huber loss (delta=1.0).

    acc_ref : (acc_rows, lanes) f32 VMEM accumulator, resident across the inner
              (reduction) grid axis.
    out_ref : (1, 1) f32 SMEM partial sum for this grid "half" (leading axis).
    """
    c = pl.program_id(0)
    i = pl.program_id(1)

    @pl.when(i == 0)
    def _():
        acc_ref[...] = jnp.zeros_like(acc_ref)

    # Cast to f32 inside the kernel (no extra HBM pass in the wrapper).
    err = yt_ref[...].astype(jnp.float32) - yp_ref[...].astype(jnp.float32)
    abs_err = jnp.abs(err)
    loss = jnp.where(abs_err < 1.0, 0.5 * err * err, abs_err - 0.5)

    if needs_row_mask:
        # Mask rows past the true row count (covers the ragged last block and
        # any clamped/duplicated logical blocks). Pure VALU; free when DMA-bound.
        start_row = (c * n_tiles + i) * tile_rows
        row_ids = start_row + lax.broadcasted_iota(jnp.int32, (tile_rows, lanes), 0)
        loss = jnp.where(row_ids < rows_valid, loss, 0.0)

    if acc_rows == tile_rows:
        acc_ref[...] += loss
    else:
        # Sublane-group partial sum: g independent vreg slabs added elementwise
        # (no XLU, and only acc_rows x lanes of vst traffic per step).
        g = tile_rows // acc_rows
        acc_ref[...] += loss.reshape(g, acc_rows, lanes).sum(axis=0)

    @pl.when(i == pl.num_programs(1) - 1)
    def _():
        out_ref[0, 0] = jnp.sum(acc_ref[...])  # single XLU reduce per half


def huber_loss(y_true: jax.Array, y_pred: jax.Array, *,
               min_kernel_elems: int = 1 << 20,
               tile_bytes: int = 4 << 20) -> jax.Array:
    """Mean Huber loss (delta=1.0) over all elements == PyTorch HuberLoss.forward."""
    assert y_true.shape == y_pred.shape
    out_dtype = jnp.result_type(y_true.dtype, y_pred.dtype)
    if y_true.dtype != out_dtype:
        y_true = y_true.astype(out_dtype)
    if y_pred.dtype != out_dtype:
        y_pred = y_pred.astype(out_dtype)

    n_elems = 1
    for d in y_true.shape:
        n_elems *= d
    if n_elems == 0:
        return jnp.asarray(jnp.nan, out_dtype)

    # Small-input fallback: a fused XLA elementwise+reduce beats fixed kernel
    # launch + per-step overhead for small batches (the common DQN case).
    if n_elems < min_kernel_elems:
        err = y_true.astype(jnp.float32) - y_pred.astype(jnp.float32)
        abs_err = jnp.abs(err)
        loss = jnp.where(abs_err < 1.0, 0.5 * err * err, abs_err - 0.5)
        return jnp.mean(loss).astype(out_dtype)

    lanes = _LANES
    itemsize = jnp.dtype(out_dtype).itemsize
    sub_min = {1: 32, 2: 16, 4: 8}.get(itemsize, 8)  # dtype-aware sublane minimum

    yt = y_true.reshape(-1)
    yp = y_pred.reshape(-1)
    if n_elems % lanes != 0:
        # Rare ragged case: pad BOTH operands with zeros so Huber(0) == 0 on
        # the tail (mean divides by the TRUE count). This costs one extra HBM
        # pass; the common lane-aligned case takes the zero-copy path below.
        pad = _round_up(n_elems, lanes) - n_elems
        yt = jnp.pad(yt, (0, pad))
        yp = jnp.pad(yp, (0, pad))
    rows = yt.shape[0] // lanes
    yt = yt.reshape(rows, lanes)   # free reshape of a contiguous array
    yp = yp.reshape(rows, lanes)

    # Generation-aware core split: only v7x has 2 TensorCores per chip.
    n_cores = _num_tensorcores()
    n_split = n_cores if rows >= 2 * 64 * n_cores else 1
    rows_per_split = _cdiv(rows, n_split)

    # Tile sizing: up to `tile_bytes` per input block, rows a multiple of 64
    # (so the 64-row accumulator grouping stays layout-free) or the full extent.
    max_tile_rows = _round_down(tile_bytes // (lanes * itemsize), 64)
    if max_tile_rows < sub_min:
        max_tile_rows = sub_min
    gran = 64 if rows_per_split >= 64 else sub_min
    tile_rows = min(max_tile_rows, _round_up(rows_per_split, gran))
    if tile_rows > rows:
        tile_rows = rows  # single full-extent block: always a legal block shape

    n_tiles = _cdiv(rows_per_split, tile_rows)
    n_blocks_valid = _cdiv(rows, tile_rows)
    needs_row_mask = (n_split * n_tiles * tile_rows) != rows
    acc_rows = 64 if (tile_rows % 64 == 0) else tile_rows

    # Clamp the logical block index so no DMA starts out of bounds; clamped
    # (duplicate) blocks are fully masked in-kernel and contribute zero.
    max_block = n_blocks_valid - 1
    in_map = lambda c, i: (jnp.minimum(c * n_tiles + i, max_block), 0)

    kernel = functools.partial(
        _huber_tile_kernel,
        n_tiles=n_tiles, tile_rows=tile_rows, acc_rows=acc_rows,
        lanes=lanes, rows_valid=rows, needs_row_mask=needs_row_mask)

    tile_input_bytes = tile_rows * lanes * itemsize
    vmem_limit = min(max(32 << 20, 4 * tile_input_bytes + (8 << 20)), 56 << 20)
    cost = pl.CostEstimate(
        flops=6 * n_elems,
        transcendentals=0,
        bytes_accessed=2 * rows * lanes * itemsize + 4 * n_split)

    partials = pl.pallas_call(
        kernel,
        out_shape=jax.ShapeDtypeStruct((n_split, 1), jnp.float32),
        grid_spec=pltpu.PrefetchScalarGridSpec(
            num_scalar_prefetch=0,
            grid=(n_split, n_tiles),
            in_specs=[
                pl.BlockSpec((tile_rows, lanes), in_map),
                pl.BlockSpec((tile_rows, lanes), in_map),
            ],
            out_specs=pl.BlockSpec(
                (1, 1), lambda c, i: (c, 0),
                memory_space=pltpu.MemorySpace.SMEM),
            scratch_shapes=[pltpu.VMEM((acc_rows, lanes), jnp.float32)],
        ),
        compiler_params=pltpu.CompilerParams(
            dimension_semantics=("parallel", "arbitrary"),
            vmem_limit_bytes=vmem_limit,
        ),
        cost_estimate=cost,
    )(yt, yp)

    # Combine per-core partial sums; divide by the TRUE element count.
    return (jnp.sum(partials) / jnp.float32(n_elems)).astype(out_dtype)


def huber_loss_ref(y_true, y_pred):
    err = y_true.astype(jnp.float32) - y_pred.astype(jnp.float32)
    abs_err = jnp.abs(err)
    loss = jnp.where(abs_err < 1.0, 0.5 * err * err, abs_err - 0.5)
    return jnp.mean(loss)


if __name__ == "__main__":
    key = jax.random.PRNGKey(0)
    k1, k2, k3, k4, k5, k6, k7, k8 = jax.random.split(key, 8)

    # 1) DQN-pole-style shape (batch=32, 2 actions): small-input fallback path.
    y_true = jax.random.normal(k1, (32, 2), dtype=jnp.float32) * 2.0
    y_pred = jax.random.normal(k2, (32, 2), dtype=jnp.float32) * 2.0
    loss = huber_loss(y_true, y_pred)
    jax.block_until_ready(loss)
    ref = huber_loss_ref(y_true, y_pred)
    assert jnp.allclose(loss, ref, rtol=1e-6, atol=1e-6), (loss, ref)

    # 2) Same tiny shape forced through the Pallas kernel (ragged -> lane pad).
    loss_k = huber_loss(y_true, y_pred, min_kernel_elems=0)
    jax.block_until_ready(loss_k)
    assert jnp.allclose(loss_k, ref, rtol=1e-6, atol=1e-6), (loss_k, ref)

    # 3) Lane-aligned shape, small tiles -> multi-tile + in-kernel row masking
    #    (zero-copy path: no jnp.pad, ragged row tail handled by the mask).
    a = jax.random.normal(k3, (1050, 128), dtype=jnp.float32) * 2.0
    b = jax.random.normal(k4, (1050, 128), dtype=jnp.float32) * 2.0
    loss3 = huber_loss(a, b, min_kernel_elems=0, tile_bytes=64 * 1024)
    jax.block_until_ready(loss3)
    ref3 = huber_loss_ref(a, b)
    assert jnp.allclose(loss3, ref3, rtol=1e-5, atol=1e-6), (loss3, ref3)

    # 4) Ragged shape exercising the zero-pad fallback inside the kernel path.
    c = jax.random.normal(k5, (130, 70), dtype=jnp.float32) * 2.0
    d = jax.random.normal(k6, (130, 70), dtype=jnp.float32) * 2.0
    loss4 = huber_loss(c, d, min_kernel_elems=0)
    jax.block_until_ready(loss4)
    ref4 = huber_loss_ref(c, d)
    assert jnp.allclose(loss4, ref4, rtol=1e-5, atol=1e-6), (loss4, ref4)

    # 5) bf16 inputs: native-dtype streaming + in-kernel f32 widen.
    e = (jax.random.normal(k7, (256, 512), dtype=jnp.float32) * 2.0).astype(jnp.bfloat16)
    f = (jax.random.normal(k8, (256, 512), dtype=jnp.float32) * 2.0).astype(jnp.bfloat16)
    loss5 = huber_loss(e, f, min_kernel_elems=0, tile_bytes=64 * 1024)
    jax.block_until_ready(loss5)
    ref5 = huber_loss_ref(e, f).astype(jnp.bfloat16)
    assert jnp.allclose(loss5.astype(jnp.float32), ref5.astype(jnp.float32),
                        rtol=1e-2, atol=1e-3), (loss5, ref5)

    print("KERNEL_OK")
</pallas_src>

<mosaic_0001>
module attributes {stable_mosaic.version = 11 : i64} {
  func.func @_huber_tile_kernel(%arg0: i32, %arg1: i32, %arg2: memref<1x128xf32, #tpu.memory_space<vmem>>, %arg3: memref<1x128xf32, #tpu.memory_space<vmem>>, %arg4: memref<1x1xf32, #tpu.memory_space<smem>>, %arg5: memref<1x128xf32, #tpu.memory_space<vmem>>) attributes {dimension_semantics = [#tpu.dimension_semantics<parallel>, #tpu.dimension_semantics<arbitrary>], iteration_bounds = array<i64: 1, 1>, scalar_prefetch = 0 : i64, scratch_operands = 1 : i64, tpu.core_type = #tpu.core_type<tc>, window_params = [{transform_indices = @transform_0, window_bounds = array<i64: 1, 128>}, {transform_indices = @transform_1, window_bounds = array<i64: 1, 128>}, {transform_indices = @transform_2, window_bounds = array<i64: 1, 1>}]} {
    %c0_i32 = arith.constant 0 : i32
    %0 = arith.cmpi eq, %arg1, %c0_i32 : i32
    %1 = arith.extui %0 : i1 to i32
    %c0_i32_0 = arith.constant 0 : i32
    %2 = arith.cmpi ne, %1, %c0_i32_0 : i32
    scf.if %2 {
      %cst_12 = arith.constant 0.000000e+00 : f32
      %21 = vector.broadcast %cst_12 : f32 to vector<1x128xf32>
      %c0_13 = arith.constant 0 : index
      %c0_14 = arith.constant 0 : index
      %22 = vector.load %arg5[%c0_13, %c0_14] : memref<1x128xf32, #tpu.memory_space<vmem>>, vector<1x128xf32>
      tpu.vector_store %arg5[%c0_13, %c0_14], %21 {strides = array<i32>} : memref<1x128xf32, #tpu.memory_space<vmem>>, vector<1x128xf32>,
    } else {
    }
    %c0 = arith.constant 0 : index
    %c0_1 = arith.constant 0 : index
    %3 = vector.load %arg2[%c0, %c0_1] : memref<1x128xf32, #tpu.memory_space<vmem>>, vector<1x128xf32>
    %c0_2 = arith.constant 0 : index
    %c0_3 = arith.constant 0 : index
    %4 = vector.load %arg3[%c0_2, %c0_3] : memref<1x128xf32, #tpu.memory_space<vmem>>, vector<1x128xf32>
    %5 = arith.subf %3, %4 : vector<1x128xf32>
    %6 = math.absf %5 : vector<1x128xf32>
    %cst = arith.constant 1.000000e+00 : f32
    %7 = vector.broadcast %cst : f32 to vector<1x128xf32>
    %8 = arith.cmpf olt, %6, %7 : vector<1x128xf32>
    %cst_4 = arith.constant 5.000000e-01 : f32
    %9 = vector.broadcast %cst_4 : f32 to vector<1x128xf32>
    %10 = arith.mulf %9, %5 : vector<1x128xf32>
    %11 = arith.mulf %10, %5 : vector<1x128xf32>
    %cst_5 = arith.constant 5.000000e-01 : f32
    %12 = vector.broadcast %cst_5 : f32 to vector<1x128xf32>
    %13 = arith.subf %6, %12 : vector<1x128xf32>
    %14 = arith.select %8, %11, %13 : vector<1x128xi1>, vector<1x128xf32>
    %c0_6 = arith.constant 0 : index
    %c0_7 = arith.constant 0 : index
    %15 = vector.load %arg5[%c0_6, %c0_7] : memref<1x128xf32, #tpu.memory_space<vmem>>, vector<1x128xf32>
    %16 = arith.addf %15, %14 : vector<1x128xf32>
    %c0_8 = arith.constant 0 : index
    %c0_9 = arith.constant 0 : index
    %17 = vector.load %arg5[%c0_8, %c0_9] : memref<1x128xf32, #tpu.memory_space<vmem>>, vector<1x128xf32>
    tpu.vector_store %arg5[%c0_8, %c0_9], %16 {strides = array<i32>} : memref<1x128xf32, #tpu.memory_space<vmem>>, vector<1x128xf32>,
    %c0_i32_10 = arith.constant 0 : i32
    %18 = arith.cmpi eq, %arg1, %c0_i32_10 : i32
    %19 = arith.extui %18 : i1 to i32
    %c0_i32_11 = arith.constant 0 : i32
    %20 = arith.cmpi ne, %19, %c0_i32_11 : i32
    scf.if %20 {
      %c0_12 = arith.constant 0 : index
      %c0_13 = arith.constant 0 : index
      %21 = vector.load %arg5[%c0_12, %c0_13] : memref<1x128xf32, #tpu.memory_space<vmem>>, vector<1x128xf32>
      %22 = vector.shape_cast %21 : vector<1x128xf32> to vector<1x1x128xf32>
      %cst_14 = arith.constant dense<0.000000e+00> : vector<1xf32>
      %23 = vector.multi_reduction <add>, %22, %cst_14 [1, 2] : vector<1x1x128xf32> to vector<1xf32>
      %24 = vector.shape_cast %23 : vector<1xf32> to vector<1x1x1xf32>
      %25 = vector.extract %24[0, 0, 0] : f32 from vector<1x1x1xf32>
      %c0_15 = arith.constant 0 : index
      %c0_16 = arith.constant 0 : index
      %26 = memref.load %arg4[%c0_15, %c0_16] : memref<1x1xf32, #tpu.memory_space<smem>>
      memref.store %25, %arg4[%c0_15, %c0_16] : memref<1x1xf32, #tpu.memory_space<smem>>
    } else {
    }
    return
  }
  func.func @transform_0(%arg0: i32, %arg1: i32) -> (i32, i32) {
    %c1_i32 = arith.constant 1 : i32
    %0 = arith.muli %arg0, %c1_i32 : i32
    %1 = arith.addi %0, %arg1 : i32
    %c0_i32 = arith.constant 0 : i32
    %2 = arith.minsi %1, %c0_i32 : i32
    %c0_i32_0 = arith.constant 0 : i32
    %c0_i32_1 = arith.constant 0 : i32
    return %2, %c0_i32_0 : i32, i32
  }
  func.func @transform_1(%arg0: i32, %arg1: i32) -> (i32, i32) {
    %c1_i32 = arith.constant 1 : i32
    %0 = arith.muli %arg0, %c1_i32 : i32
    %1 = arith.addi %0, %arg1 : i32
    %c0_i32 = arith.constant 0 : i32
    %2 = arith.minsi %1, %c0_i32 : i32
    %c0_i32_0 = arith.constant 0 : i32
    %c0_i32_1 = arith.constant 0 : i32
    return %2, %c0_i32_0 : i32, i32
  }
  func.func @transform_2(%arg0: i32, %arg1: i32) -> (i32, i32) {
    %c0_i32 = arith.constant 0 : i32
    %c0_i32_0 = arith.constant 0 : i32
    return %arg0, %c0_i32 : i32, i32
  }
}

</mosaic_0001>

<llo_original>
// kernel: tpu_custom_call.1
$region0: #{tpu_custom_call.1}
  #allocation0 [shape = 'u32[]', space=smem, size = 0x4, offset = 0x4, fixed_abs, tag = 'smem constant byte address 0x4 - core index']
  #allocation1 [shape = 'u32[144,128]{1,0:T(1,128)}', space=vmem, size = 0x12000, scoped, tag = 'internal scratch']
  #allocation2 [shape = 'f32[1,128]{1,0:T(1,128)}', space=vmem, size = 0x200, scoped, tag = 'scratch operand']
  %s0 = inlined_call_operand.hbm [shape: f32[1,128], index: 0, kind: input, shape index: {}]
  %s1 = inlined_call_operand.vmem [shape: f32[1,128], index: 1, kind: input, shape index: {}]
  %s2 = inlined_call_operand.hbm [shape: f32[1,1], index: 2, kind: output, shape index: {}]
  %s3 = sld [smem:[#allocation0]]
  $region30: #{tpu_custom_call.1} parent=0
    _
  %s5 = ssub.s32 1, %s3
  %s6 = scalar_select 0, %s5, %s3
  $region1: #{tpu_custom_call.1} parent=0
    #allocation3 [shape = 'u8[512]{0}', space=vmem, size = 0x400, scoped, tag = 'input window, operand 0, single buffered']
    #allocation4 [shape = 's32[1]{0}', space=sflag, size = 0x4, scoped, tag = 'scoped memory for tpu_custom_call.1']
    #allocation5 [shape = 's32[1]{0}', space=sflag, size = 0x4, scoped, tag = 'scoped memory for tpu_custom_call.1']
    #allocation6 [shape = 'u8[512]{0}', space=smem, size = 0x200, scoped, tag = 'output window, operand 0, single buffered']
    %7 = vsyncpa [#allocation4], 0
    %8 = vsyncpa [#allocation5], 0
    // Predicated region
    $region2: #{tpu_custom_call.1} parent=1 // pred_check
      _
    $region3: #{tpu_custom_call.1} parent=1 // pred_check_branch
      %10 = sbr.rel (0) target = $region5
    $region4: #{tpu_custom_call.1} parent=1 // pred_region
      %s11 = sadd.s32 0, 0
      %p12 = scmp.lt.s32.totalorder %s11, 0
      %s13 = scalar_select %p12, %s11, 0
      %s15 = ssub.s32 16, 16
      %16 = vsyncadd [#allocation4], %s15
      %s17 = smul.addr %s13, 16
      %s18 = scalar_lea.hbm %s0, %s17
      %s20 = sshll.u32 [#allocation3], 4
      %s21 = int_to_ptr.vmem [resolvable:$true] %s20
      %23 = dma.hbm_to_vmem [thread:$0]  %s18, 16, %s21, [#allocation4]
    $region5: #{tpu_custom_call.1} parent=1 // pred_fallthru
      _
    // Predicated region
    $region6: #{tpu_custom_call.1} parent=1 // pred_check
      _
    $region7: #{tpu_custom_call.1} parent=1 // pred_check_branch
      %25 = sbr.rel (0) target = $region9
    $region8: #{tpu_custom_call.1} parent=1 // pred_region
      %s26 = sadd.s32 0, 0
      %p27 = scmp.lt.s32.totalorder %s26, 0
      %s28 = scalar_select %p27, %s26, 0
      %p29 = scmp.lt.s32.totalorder %s28, 0
      %s30 = scalar_select %p29, %s28, 0
      %s31 = scalar_lea.vmem %s1, %s30
      %s32 = sadd.s32 0, 0
      %p33 = scmp.lt.s32.totalorder %s32, 0
      %s34 = scalar_select %p33, %s32, 0
    $region9: #{tpu_custom_call.1} parent=1 // pred_fallthru
      _
    // Predicated region
    $region10: #{tpu_custom_call.1} parent=1 // pred_check
      _
    $region11: #{tpu_custom_call.1} parent=1 // pred_check_branch
      %36 = sbr.rel (0) target = $region13
    $region12: #{tpu_custom_call.1} parent=1 // pred_region
      %37 = dma.done [#allocation4], 16
    $region13: #{tpu_custom_call.1} parent=1 // pred_fallthru
      _
    %s38 = sadd.s32 0, 0
    %p39 = scmp.lt.s32.totalorder %s38, 0
    %s40 = scalar_select %p39, %s38, 0
    %p41 = scmp.lt.s32.totalorder %s40, 0
    %s42 = scalar_select %p41, %s40, 0
    %s43 = scalar_lea.vmem %s1, %s42
    %s44 = sadd.s32 0, 0
    %p45 = scmp.lt.s32.totalorder %s44, 0
    %s46 = scalar_select %p45, %s44, 0
    %s47 = sadd.s32 0, 0
    %p48 = scmp.lt.s32.totalorder %s47, 0
    %s49 = scalar_select %p48, %s47, 0
    %p50 = scmp.lt.s32.totalorder %s49, 0
    %s51 = scalar_select %p50, %s49, 0
    %s52 = scalar_lea.vmem %s1, %s51
    %s53 = sadd.s32 0, 0
    %p54 = scmp.lt.s32.totalorder %s53, 0
    %s55 = scalar_select %p54, %s53, 0
    %p56 = scmp.eq.s32.totalorder 0, 0
    // Predicated region
    $region14: #{tpu_custom_call.1} parent=1 // pred_check
      %p57 = pneg %p56
    $region15: #{tpu_custom_call.1} parent=1 // pred_check_branch
      %59 = sbr.rel (%p57) target = $region17
    $region16: #{tpu_custom_call.1} parent=1 // pred_region
      %60 = vst [vmem:[#allocation2] sm:$0x1] 0.0
    $region17: #{tpu_custom_call.1} parent=1 // pred_fallthru
      _
    %v61 = vld [vmem:[#allocation3] sm:$0x1]
    %v62 = vld [vmem:[%s52] sm:$0x1]
    %v63 = vsub.f32 %v61, %v62
    %v64 = vand.u32 2147483647, %v63
    %vm65 = vcmp.lt.f32.partialorder %v64, 1.0
    %v66 = vmul.f32 %v63, 0.5
    %v67 = vmul.f32 %v66, %v63
    %v68 = vsub.f32 %v64, 0.5
    %v69 = vsel %vm65, %v67, %v68
    %v70 = vld [vmem:[#allocation2] sm:$0x1]
    %v71 = vadd.f32 %v70, %v69
    %72 = vst [vmem:[#allocation2] sm:$0x1] %v71
    // Predicated region
    $region18: #{tpu_custom_call.1} parent=1 // pred_check
      %p73 = pneg %p56
    $region19: #{tpu_custom_call.1} parent=1 // pred_check_branch
      %75 = sbr.rel (%p73) target = $region21
    $region20: #{tpu_custom_call.1} parent=1 // pred_region
      %v76 = vld [vmem:[#allocation2] sm:$0x1]
      %vm77 = vcmask 1040384
      %v78 = vsel %vm77, %v76, 0.0
      %79 = vadd.xlane.f32.xlu0 %v78
      %v80 = vpop.xlane.xlu0 %79
      %v81 = vrot.slane %v80, 4
      %v82 = vadd.f32 %v80, %v81
      %v83 = vrot.slane %v82, 2
      %v84 = vadd.f32 %v82, %v83
      %v85 = vrot.slane %v84, 1
      %v86 = vadd.f32 %v84, %v85
      %s87 = vtos %v86
      %s88 = scalar_lea.smem [#allocation6], 0
      %89 = sst [smem:[%s88]] %s87
    $region21: #{tpu_custom_call.1} parent=1 // pred_fallthru
      _
    // Predicated region
    $region22: #{tpu_custom_call.1} parent=1 // pred_check
      _
    $region23: #{tpu_custom_call.1} parent=1 // pred_check_branch
      %91 = sbr.rel (0) target = $region25
    $region24: #{tpu_custom_call.1} parent=1 // pred_region
      %s93 = ssub.s32 16, 16
      %94 = vsyncadd [#allocation5], %s93
      %97 = dma.smem_to_hbm [#allocation6], 16, %s2, [#allocation5]
    $region25: #{tpu_custom_call.1} parent=1 // pred_fallthru
      _
    // Predicated region
    $region26: #{tpu_custom_call.1} parent=1 // pred_check
      _
    $region27: #{tpu_custom_call.1} parent=1 // pred_check_branch
      %99 = sbr.rel (0) target = $region29
    $region28: #{tpu_custom_call.1} parent=1 // pred_region
      %100 = dma.done [#allocation5], 16
    $region29: #{tpu_custom_call.1} parent=1 // pred_fallthru
      _
    %101 = sfence
    %102 = vsyncpa [#allocation4], 1
    %103 = vsyncpa [#allocation5], 1

</llo_original>
